<compile_context>
chip_gen: v6e
topology: v6e:2x2x1
jax: 0.10.0
libtpu: 0.0.40
codegen_flags: <defaults>
</compile_context>

<pallas_src>
import jax
import jax.numpy as jnp
from jax.experimental import pallas as pl
from jax.experimental.pallas import tpu as pltpu

N_INPUT = 43
N_HIDDEN = 62
N_OUTPUT = 1

IN_PAD = 128     # lane-aligned contraction dim for the layer-1 matmul
HID_PAD = 128    # lane-aligned hidden dim
PARAM_ROWS = 8   # sublane-aligned small-parameter block: b1 / W2-row / b2


def _round_up(n, m):
    return ((n + m - 1) // m) * m


def _choose_tile_b(B, max_tile_b=1024):
    """Batch tile: multiple of 8, <= max_tile_b; small batches are split into
    two blocks so the 'parallel' grid axis can shard across v7x's 2 TCs."""
    b8 = _round_up(max(B, 1), 8)
    if b8 <= 16:
        return b8
    if b8 <= 2 * max_tile_b:
        return min(_round_up((b8 + 1) // 2, 8), max_tile_b)
    return max_tile_b


def mlp_kernel(x_ref, w1_ref, p_ref, o_ref, xp_ref):
    # Lane-pad x inside VMEM: zero the aligned scratch, copy the 43 real
    # lanes in (cheap VMEM-only work, no HBM traffic).  Padded lanes hit
    # explicit zero rows of W1, so the matmul below is exact.
    xp_ref[...] = jnp.zeros_like(xp_ref)
    xp_ref[:, :N_INPUT] = x_ref[...]

    # Layer 1 on the MXU: aligned (tile_b,128) x (128,128), f32 accumulate.
    h = jnp.dot(xp_ref[...], w1_ref[...], preferred_element_type=jnp.float32)
    h = jax.nn.sigmoid(h + p_ref[0:1, :])            # VPU bias add + EUP sigmoid

    # Layer 2 has a single output feature: VPU multiply + lane reduce against
    # the W2 row (padded hidden lanes carry sigmoid(0)=0.5 but hit zero W2).
    y = jnp.sum(h * p_ref[1:2, :], axis=-1, keepdims=True)     # (tile_b, 1)
    o_ref[...] = (y + p_ref[2:3, 0:1]).astype(o_ref.dtype)     # + b2


def net_forward(x, w1p, pp, *, max_tile_b=1024):
    """x: (B, N_INPUT) f32; (w1p, pp) from `pad_params`. Returns (B, 1) f32."""
    B = x.shape[0]
    tile_b = _choose_tile_b(B, max_tile_b)
    grid = (pl.cdiv(B, tile_b),)

    return pl.pallas_call(
        mlp_kernel,
        out_shape=jax.ShapeDtypeStruct((B, N_OUTPUT), jnp.float32),
        grid_spec=pltpu.PrefetchScalarGridSpec(
            num_scalar_prefetch=0,
            grid=grid,
            in_specs=[
                # x: only the batch axis is tiled; last block dim == full
                # array dim (43) is legal, so no wrapper-side feature pad.
                pl.BlockSpec((tile_b, N_INPUT), lambda i: (i, 0)),
                pl.BlockSpec((IN_PAD, HID_PAD), lambda i: (0, 0)),      # W1 (resident)
                pl.BlockSpec((PARAM_ROWS, HID_PAD), lambda i: (0, 0)),  # b1 / W2 / b2
            ],
            out_specs=pl.BlockSpec((tile_b, N_OUTPUT), lambda i: (i, 0)),
            scratch_shapes=[pltpu.VMEM((tile_b, IN_PAD), jnp.float32)],
        ),
        compiler_params=pltpu.CompilerParams(
            dimension_semantics=("parallel",)),   # batch tiles shard across TCs
    )(x, w1p, pp)


def init_params(key):
    """torch.nn.Linear default init: U(-1/sqrt(fan_in), +1/sqrt(fan_in)).
    Weights stored as (in, out)."""
    k1, k2, k3, k4 = jax.random.split(key, 4)
    bound1 = 1.0 / jnp.sqrt(jnp.float32(N_INPUT))
    bound2 = 1.0 / jnp.sqrt(jnp.float32(N_HIDDEN))
    w1 = jax.random.uniform(k1, (N_INPUT, N_HIDDEN), jnp.float32,
                            minval=-bound1, maxval=bound1)
    b1 = jax.random.uniform(k2, (1, N_HIDDEN), jnp.float32,
                            minval=-bound1, maxval=bound1)
    w2 = jax.random.uniform(k3, (N_HIDDEN, N_OUTPUT), jnp.float32,
                            minval=-bound2, maxval=bound2)
    b2 = jax.random.uniform(k4, (1, N_OUTPUT), jnp.float32,
                            minval=-bound2, maxval=bound2)
    return w1, b1, w2, b2


def pad_params(w1, b1, w2, b2):
    """One-time zero-padding / packing of the parameters:
      w1p: (128, 128) with the real (43, 62) block in the corner (zero pad
           rows cancel whatever sits in the padded x lanes),
      pp : (8, 128) small-parameter block: row 0 = b1, row 1 = W2^T, [2,0] = b2."""
    w1p = jnp.zeros((IN_PAD, HID_PAD), jnp.float32).at[:N_INPUT, :N_HIDDEN].set(w1)
    pp = jnp.zeros((PARAM_ROWS, HID_PAD), jnp.float32)
    pp = pp.at[0, :N_HIDDEN].set(b1.reshape(-1))
    pp = pp.at[1, :N_HIDDEN].set(w2.reshape(-1))
    pp = pp.at[2, 0].set(b2[0, 0])
    return w1p, pp


if __name__ == "__main__":
    key = jax.random.PRNGKey(0)
    kx, kp = jax.random.split(key)
    batch = 100  # matches x = torch.randn(100, n_input) in the reference
    x = jax.random.normal(kx, (batch, N_INPUT), jnp.float32)
    w1, b1, w2, b2 = init_params(kp)
    w1p, pp = pad_params(w1, b1, w2, b2)

    out = net_forward(x, w1p, pp)
    out = jax.block_until_ready(out)

    # Pure-JAX reference check of the same (unpadded) forward pass.
    ref = jnp.dot(jax.nn.sigmoid(jnp.dot(x, w1) + b1), w2) + b2
    assert out.shape == (batch, N_OUTPUT)
    assert jnp.allclose(out, ref, atol=1e-5, rtol=1e-5)

    print("KERNEL_OK")
</pallas_src>

<mosaic_0001>
module attributes {stable_mosaic.version = 11 : i64} {
  func.func @mlp_kernel(%arg0: i32, %arg1: memref<56x43xf32, #tpu.memory_space<vmem>>, %arg2: memref<128x128xf32, #tpu.memory_space<vmem>>, %arg3: memref<8x128xf32, #tpu.memory_space<vmem>>, %arg4: memref<56x1xf32, #tpu.memory_space<vmem>>, %arg5: memref<56x128xf32, #tpu.memory_space<vmem>>) attributes {dimension_semantics = [#tpu.dimension_semantics<parallel>], iteration_bounds = array<i64: 2>, scalar_prefetch = 0 : i64, scratch_operands = 1 : i64, tpu.core_type = #tpu.core_type<tc>, window_params = [{transform_indices = @transform_0, window_bounds = array<i64: 56, 43>}, {pipeline_mode = #tpu.pipeline_mode<synchronous>, transform_indices = @transform_1, window_bounds = array<i64: 128, 128>}, {pipeline_mode = #tpu.pipeline_mode<synchronous>, transform_indices = @transform_2, window_bounds = array<i64: 8, 128>}, {transform_indices = @transform_3, window_bounds = array<i64: 56, 1>}]} {
    %cst = arith.constant 0.000000e+00 : f32
    %0 = vector.broadcast %cst : f32 to vector<56x128xf32>
    %c0 = arith.constant 0 : index
    %c0_0 = arith.constant 0 : index
    %1 = vector.load %arg5[%c0, %c0_0] : memref<56x128xf32, #tpu.memory_space<vmem>>, vector<56x128xf32>
    tpu.vector_store %arg5[%c0, %c0_0], %0 {strides = array<i32>} : memref<56x128xf32, #tpu.memory_space<vmem>>, vector<56x128xf32>,
    %c0_1 = arith.constant 0 : index
    %c0_2 = arith.constant 0 : index
    %2 = vector.load %arg1[%c0_1, %c0_2] : memref<56x43xf32, #tpu.memory_space<vmem>>, vector<56x43xf32>
    %c0_3 = arith.constant 0 : index
    %c0_4 = arith.constant 0 : index
    %3 = vector.load %arg5[%c0_3, %c0_4] : memref<56x128xf32, #tpu.memory_space<vmem>>, vector<56x43xf32>
    tpu.vector_store %arg5[%c0_3, %c0_4], %2 {strides = array<i32>} : memref<56x128xf32, #tpu.memory_space<vmem>>, vector<56x43xf32>,
    %c0_5 = arith.constant 0 : index
    %c0_6 = arith.constant 0 : index
    %4 = vector.load %arg5[%c0_5, %c0_6] : memref<56x128xf32, #tpu.memory_space<vmem>>, vector<56x128xf32>
    %c0_7 = arith.constant 0 : index
    %c0_8 = arith.constant 0 : index
    %5 = vector.load %arg2[%c0_7, %c0_8] : memref<128x128xf32, #tpu.memory_space<vmem>>, vector<128x128xf32>
    %cst_9 = arith.constant dense<0.000000e+00> : vector<56x128xf32>
    %6 = tpu.matmul %4, %5, %cst_9 {dimension_numbers = #tpu.dot_dimension_numbers<[1], [0], [0], [1], [0, 0, 1, 1], [], []>} : vector<56x128xf32>, vector<128x128xf32>, vector<56x128xf32> -> vector<56x128xf32>
    %c0_10 = arith.constant 0 : index
    %c0_11 = arith.constant 0 : index
    %7 = vector.load %arg3[%c0_10, %c0_11] : memref<8x128xf32, #tpu.memory_space<vmem>>, vector<1x128xf32>
    %8 = vector.broadcast %7 : vector<1x128xf32> to vector<56x128xf32>
    %9 = arith.addf %6, %8 : vector<56x128xf32>
    %10 = arith.negf %9 : vector<56x128xf32>
    %11 = math.exp %10 : vector<56x128xf32>
    %cst_12 = arith.constant 1.000000e+00 : f32
    %12 = vector.broadcast %cst_12 : f32 to vector<56x128xf32>
    %13 = arith.addf %12, %11 : vector<56x128xf32>
    %14 = arith.divf %12, %13 : vector<56x128xf32>
    %c1 = arith.constant 1 : index
    %c0_13 = arith.constant 0 : index
    %15 = vector.load %arg3[%c1, %c0_13] : memref<8x128xf32, #tpu.memory_space<vmem>>, vector<1x128xf32>
    %16 = vector.broadcast %15 : vector<1x128xf32> to vector<56x128xf32>
    %17 = arith.mulf %14, %16 : vector<56x128xf32>
    %cst_14 = arith.constant dense<0.000000e+00> : vector<56xf32>
    %18 = vector.multi_reduction <add>, %17, %cst_14 [1] : vector<56x128xf32> to vector<56xf32>
    %19 = vector.shape_cast %18 : vector<56xf32> to vector<56x1xf32>
    %c2 = arith.constant 2 : index
    %c0_15 = arith.constant 0 : index
    %20 = vector.load %arg3[%c2, %c0_15] : memref<8x128xf32, #tpu.memory_space<vmem>>, vector<1x1xf32>
    %21 = vector.broadcast %20 : vector<1x1xf32> to vector<56x1xf32>
    %22 = arith.addf %19, %21 : vector<56x1xf32>
    %c0_16 = arith.constant 0 : index
    %c0_17 = arith.constant 0 : index
    %23 = vector.load %arg4[%c0_16, %c0_17] : memref<56x1xf32, #tpu.memory_space<vmem>>, vector<56x1xf32>
    tpu.vector_store %arg4[%c0_16, %c0_17], %22 {strides = array<i32>} : memref<56x1xf32, #tpu.memory_space<vmem>>, vector<56x1xf32>,
    return
  }
  func.func @transform_0(%arg0: i32) -> (i32, i32) {
    %c0_i32 = arith.constant 0 : i32
    %c0_i32_0 = arith.constant 0 : i32
    return %arg0, %c0_i32 : i32, i32
  }
  func.func @transform_1(%arg0: i32) -> (i32, i32) {
    %c0_i32 = arith.constant 0 : i32
    %c0_i32_0 = arith.constant 0 : i32
    %c0_i32_1 = arith.constant 0 : i32
    return %c0_i32, %c0_i32_0 : i32, i32
  }
  func.func @transform_2(%arg0: i32) -> (i32, i32) {
    %c0_i32 = arith.constant 0 : i32
    %c0_i32_0 = arith.constant 0 : i32
    %c0_i32_1 = arith.constant 0 : i32
    return %c0_i32, %c0_i32_0 : i32, i32
  }
  func.func @transform_3(%arg0: i32) -> (i32, i32) {
    %c0_i32 = arith.constant 0 : i32
    %c0_i32_0 = arith.constant 0 : i32
    return %arg0, %c0_i32 : i32, i32
  }
}

</mosaic_0001>

<llo_original>
// kernel: tpu_custom_call.1
$region0: #{tpu_custom_call.1}
  #allocation0 [shape = 'u32[]', space=smem, size = 0x4, offset = 0x4, fixed_abs, tag = 'smem constant byte address 0x4 - core index']
  #allocation1 [shape = 'u32[144,128]{1,0:T(1,128)}', space=vmem, size = 0x12000, scoped, tag = 'internal scratch']
  #allocation2 [shape = 'f32[56,128]{1,0:T(8,128)}', space=vmem, size = 0x7000, scoped, tag = 'scratch operand']
  %s0 = inlined_call_operand.vmem [shape: f32[100,43], index: 0, kind: input, shape index: {}]
  %s1 = inlined_call_operand.vmem [shape: f32[128,128], index: 1, kind: input, shape index: {}]
  %s2 = inlined_call_operand.vmem [shape: f32[8,128], index: 2, kind: input, shape index: {}]
  %s3 = inlined_call_operand.vmem [shape: f32[100,1], index: 3, kind: output, shape index: {}]
  %s4 = sld [smem:[#allocation0]]
  $region93: #{tpu_custom_call.1} parent=0
    _
  %s6 = ssub.s32 1, %s4
  %s7 = scalar_select 0, %s6, %s4
  $region1: #{tpu_custom_call.1} parent=0
    #allocation3 [shape = 'u8[57344]{0}', space=vmem, size = 0xe000, scoped, tag = 'output window, operand 0']
    loop: start=0, step=1, limit=4
    $region2: #{tpu_custom_call.1} parent=1 // loop_pre_header
      _
    $region3: #{tpu_custom_call.1} parent=1 // loop_header
      %s9 = sphi 0, %s13
      %p10 = scmp.ge.s32.totalorder %s9, 4
      %s19 = sphi 0, %s21
      %s22 = sphi 0, %s19
      %s23 = sphi 0, %s22
      %s39 = sphi 0, %s23
      %s43 = sphi 0, %s43
      %s45 = sphi 0, %s43
      %s46 = sphi 0, %s45
      %s60 = sphi 0, %s46
      %s64 = sphi 0, %s64
      %s66 = sphi 0, %s64
      %s67 = sphi 0, %s66
      %s81 = sphi 0, %s67
      %s87 = sphi 0, %s89
      %s90 = sphi 0, %s87
      %s91 = sphi 0, %s90
      %s107 = sphi 0, %s91
    $region4: #{tpu_custom_call.1} parent=1 // loop_header_branch
      %12 = sbr.rel (%p10) target = $region8
    $region5: #{tpu_custom_call.1} parent=1 // loop_body
      %s14 = ssub.s32 %s9, 1
      %s15 = ssub.s32 %s9, 2
      %s16 = sadd.s32 %s9, 1
      %s17 = ssub.s32 %s9, %s16
      %p18 = scmp.eq.s32.totalorder %s17, 0
      %s20 = sadd.s32 %s19, 1
      %s21 = scalar_select %p18, %s19, %s20
      %p24 = pneg %p18
      %p25 = scmp.eq.s32.totalorder %s9, 1
      %p26 = por %p24, %p25
      %p27 = scmp.ne.s32.totalorder %s19, %s22
      %p28 = scmp.eq.s32.totalorder %s9, 0
      %p29 = por %p27, %p28
      %p30 = scmp.ne.s32.totalorder %s19, %s22
      %p31 = scmp.eq.s32.totalorder %s14, 1
      %p32 = por %p30, %p31
      %p33 = scmp.ne.s32.totalorder %s22, %s23
      %p34 = scmp.eq.s32.totalorder %s14, 0
      %p35 = por %p33, %p34
      %p36 = scmp.ne.s32.totalorder %s22, %s23
      %p37 = scmp.eq.s32.totalorder %s15, 1
      %p38 = por %p36, %p37
      %p40 = scmp.ne.s32.totalorder %s23, %s39
      %p41 = scmp.eq.s32.totalorder %s15, 0
      %p42 = por %p40, %p41
      %s44 = sadd.s32 %s43, 1
      %p47 = scmp.eq.s32.totalorder %s9, 1
      %p48 = scmp.ne.s32.totalorder %s43, %s45
      %p49 = scmp.eq.s32.totalorder %s9, 0
      %p50 = por %p48, %p49
      %p51 = scmp.ne.s32.totalorder %s43, %s45
      %p52 = scmp.eq.s32.totalorder %s14, 1
      %p53 = por %p51, %p52
      %p54 = scmp.ne.s32.totalorder %s45, %s46
      %p55 = scmp.eq.s32.totalorder %s14, 0
      %p56 = por %p54, %p55
      %p57 = scmp.ne.s32.totalorder %s45, %s46
      %p58 = scmp.eq.s32.totalorder %s15, 1
      %p59 = por %p57, %p58
      %p61 = scmp.ne.s32.totalorder %s46, %s60
      %p62 = scmp.eq.s32.totalorder %s15, 0
      %p63 = por %p61, %p62
      %s65 = sadd.s32 %s64, 1
      %p68 = scmp.eq.s32.totalorder %s9, 1
      %p69 = scmp.ne.s32.totalorder %s64, %s66
      %p70 = scmp.eq.s32.totalorder %s9, 0
      %p71 = por %p69, %p70
      %p72 = scmp.ne.s32.totalorder %s64, %s66
      %p73 = scmp.eq.s32.totalorder %s14, 1
      %p74 = por %p72, %p73
      %p75 = scmp.ne.s32.totalorder %s66, %s67
      %p76 = scmp.eq.s32.totalorder %s14, 0
      %p77 = por %p75, %p76
      %p78 = scmp.ne.s32.totalorder %s66, %s67
      %p79 = scmp.eq.s32.totalorder %s15, 1
      %p80 = por %p78, %p79
      %p82 = scmp.ne.s32.totalorder %s67, %s81
      %p83 = scmp.eq.s32.totalorder %s15, 0
      %p84 = por %p82, %p83
      %s85 = ssub.s32 %s9, %s16
      %p86 = scmp.eq.s32.totalorder %s85, 0
      %s88 = sadd.s32 %s87, 1
      %s89 = scalar_select %p86, %s87, %s88
      %p92 = pneg %p86
      %p93 = scmp.eq.s32.totalorder %s9, 1
      %p94 = por %p92, %p93
      %p95 = scmp.ne.s32.totalorder %s87, %s90
      %p96 = scmp.eq.s32.totalorder %s9, 0
      %p97 = por %p95, %p96
      %p98 = scmp.ne.s32.totalorder %s87, %s90
      %p99 = scmp.eq.s32.totalorder %s14, 1
      %p100 = por %p98, %p99
      %p101 = scmp.ne.s32.totalorder %s90, %s91
      %p102 = scmp.eq.s32.totalorder %s14, 0
      %p103 = por %p101, %p102
      %p104 = scmp.ne.s32.totalorder %s90, %s91
      %p105 = scmp.eq.s32.totalorder %s15, 1
      %p106 = por %p104, %p105
      %p108 = scmp.ne.s32.totalorder %s91, %s107
      %p109 = scmp.eq.s32.totalorder %s15, 0
      %p110 = por %p108, %p109
      %p111 = scmp.le.s32.totalorder 1, %s9
      %p112 = scmp.lt.s32.totalorder %s9, 3
      %p113 = pnand %p111, %p112
      %p114 = pneg %p113
      // Predicated region
      $region9: #{tpu_custom_call.1} parent=5 // pred_check
        _
      $region10: #{tpu_custom_call.1} parent=5 // pred_check_branch
        %116 = sbr.rel (%p113) target = $region12
      $region11: #{tpu_custom_call.1} parent=5 // pred_region
        %s117 = ssub.s32 %s9, 1
        // Predicated region
        $region13: #{tpu_custom_call.1} parent=11 // pred_check
          %p118 = pneg %p56
        $region14: #{tpu_custom_call.1} parent=11 // pred_check_branch
          %120 = sbr.rel (%p118) target = $region16
        $region15: #{tpu_custom_call.1} parent=11 // pred_region
          _
        $region16: #{tpu_custom_call.1} parent=11 // pred_fallthru
          _
        // Predicated region
        $region17: #{tpu_custom_call.1} parent=11 // pred_check
          %p121 = pneg %p77
        $region18: #{tpu_custom_call.1} parent=11 // pred_check_branch
          %123 = sbr.rel (%p121) target = $region20
        $region19: #{tpu_custom_call.1} parent=11 // pred_region
          _
        $region20: #{tpu_custom_call.1} parent=11 // pred_fallthru
          _
      $region12: #{tpu_custom_call.1} parent=5 // pred_fallthru
        _
      %p124 = scmp.lt.s32.totalorder %s9, 2
      // Predicated region
      $region21: #{tpu_custom_call.1} parent=5 // pred_check
        %p125 = pneg %p124
      $region22: #{tpu_custom_call.1} parent=5 // pred_check_branch
        %127 = sbr.rel (%p125) target = $region24
      $region23: #{tpu_custom_call.1} parent=5 // pred_region
        // Predicated region
        $region25: #{tpu_custom_call.1} parent=23 // pred_check
          %p128 = pneg %p29
        $region26: #{tpu_custom_call.1} parent=23 // pred_check_branch
          %130 = sbr.rel (%p128) target = $region28
        $region27: #{tpu_custom_call.1} parent=23 // pred_region
          %s131 = smul.u32 7, %s9
          %s132 = ssub.s32 13, %s131
          %p133 = scmp.lt.s32.totalorder %s132, 7
          %s134 = scalar_select %p133, %s132, 7
          %s135 = smul.u32 128, %s134
          %p136 = scmp.lt.s32.totalorder %s131, 12
          %s137 = scalar_select %p136, %s131, 12
          %s138 = smul.addr %s137, 8
          %s139 = scalar_lea.vmem %s0, %s138
          %s140 = smul.u32 7, %s9
          %s141 = ssub.s32 13, %s140
          %p142 = scmp.lt.s32.totalorder %s141, 7
          %s143 = scalar_select %p142, %s141, 7
          %s144 = smul.u32 128, %s143
        $region28: #{tpu_custom_call.1} parent=23 // pred_fallthru
          _
      $region24: #{tpu_custom_call.1} parent=5 // pred_fallthru
        _
      %p145 = scmp.le.s32.totalorder 1, %s9
      %p146 = scmp.lt.s32.totalorder %s9, 3
      %p147 = pnand %p145, %p146
      %p148 = pneg %p147
      // Predicated region
      $region29: #{tpu_custom_call.1} parent=5 // pred_check
        _
      $region30: #{tpu_custom_call.1} parent=5 // pred_check_branch
        %150 = sbr.rel (%p147) target = $region32
      $region31: #{tpu_custom_call.1} parent=5 // pred_region
        %s151 = ssub.s32 %s9, 1
        %s152 = smul.u32 7, %s14
        %s153 = ssub.s32 13, %s152
        %p154 = scmp.lt.s32.totalorder %s153, 7
        %s155 = scalar_select %p154, %s153, 7
        %s156 = smul.u32 128, %s155
        %p157 = scmp.lt.s32.totalorder %s152, 12
        %s158 = scalar_select %p157, %s152, 12
        %s159 = smul.addr %s158, 8
        %s160 = scalar_lea.vmem %s0, %s159
        %p161 = pneg %p35
        %p162 = pneg %p32
        %p163 = pneg %p56
        %p164 = pneg %p53
        %p165 = pneg %p77
        %p166 = pneg %p74
        %p167 = pneg %p103
        %p168 = pneg %p100
        %s169 = sand.u32 %s90, 1
        %s170 = sand.u32 %s90, 1
        %s171 = smul.addr %s170, 56
        %s172 = scalar_lea.vmem [#allocation3], %s171
        %s173 = smul.u32 7, %s14
        %s174 = ssub.s32 13, %s173
        %p175 = scmp.lt.s32.totalorder %s174, 7
        %s176 = scalar_select %p175, %s174, 7
        %s177 = smul.u32 128, %s176
        %p178 = scmp.lt.s32.totalorder %s173, 12
        %s179 = scalar_select %p178, %s173, 12
        %s180 = smul.addr %s179, 8
        %s181 = scalar_lea.vmem %s0, %s180
        %s182 = smul.u32 7, %s14
        %s183 = ssub.s32 13, %s182
        %p184 = scmp.lt.s32.totalorder %s183, 7
        %s185 = scalar_select %p184, %s183, 7
        %s186 = smul.u32 128, %s185
        %s187 = smul.u32 7, %s14
        %s188 = ssub.s32 13, %s187
        %p189 = scmp.lt.s32.totalorder %s188, 7
        %s190 = scalar_select %p189, %s188, 7
        %s191 = smul.u32 128, %s190
        %192 = vst [vmem:[#allocation2] sm:$0xff] 0.0
        %193 = vst [vmem:[#allocation2 + $0x8] sm:$0xff] 0.0
        %194 = vst [vmem:[#allocation2 + $0x10] sm:$0xff] 0.0
        %195 = vst [vmem:[#allocation2 + $0x18] sm:$0xff] 0.0
        %196 = vst [vmem:[#allocation2 + $0x20] sm:$0xff] 0.0
        %197 = vst [vmem:[#allocation2 + $0x28] sm:$0xff] 0.0
        %198 = vst [vmem:[#allocation2 + $0x30] sm:$0xff] 0.0
        %v199 = vld [vmem:[%s181] sm:$0xff]
        %v200 = vld [vmem:[%s181 + $0x8] sm:$0xff]
        %v201 = vld [vmem:[%s181 + $0x10] sm:$0xff]
        %v202 = vld [vmem:[%s181 + $0x18] sm:$0xff]
        %v203 = vld [vmem:[%s181 + $0x20] sm:$0xff]
        %v204 = vld [vmem:[%s181 + $0x28] sm:$0xff]
        %v205 = vld [vmem:[%s181 + $0x30] sm:$0xff]
        %vm206 = vcmask 351232
        %207 = vst.msk [vmem:[#allocation2] sm:$0xff] %vm206, %v199
        %208 = vst.msk [vmem:[#allocation2 + $0x8] sm:$0xff] %vm206, %v200
        %209 = vst.msk [vmem:[#allocation2 + $0x10] sm:$0xff] %vm206, %v201
        %210 = vst.msk [vmem:[#allocation2 + $0x18] sm:$0xff] %vm206, %v202
        %211 = vst.msk [vmem:[#allocation2 + $0x20] sm:$0xff] %vm206, %v203
        %212 = vst.msk [vmem:[#allocation2 + $0x28] sm:$0xff] %vm206, %v204
        %213 = vst.msk [vmem:[#allocation2 + $0x30] sm:$0xff] %vm206, %v205
        %v214 = vld [vmem:[#allocation2] sm:$0xff]
        %v215 = vld [vmem:[#allocation2 + $0x8] sm:$0xff]
        %v216 = vld [vmem:[#allocation2 + $0x10] sm:$0xff]
        %v217 = vld [vmem:[#allocation2 + $0x18] sm:$0xff]
        %v218 = vld [vmem:[#allocation2 + $0x20] sm:$0xff]
        %v219 = vld [vmem:[#allocation2 + $0x28] sm:$0xff]
        %v220 = vld [vmem:[#allocation2 + $0x30] sm:$0xff]
        %v221 = vld [vmem:[%s1] sm:$0xff]
        %v222 = vld [vmem:[%s1 + $0x8] sm:$0xff]
        %v223 = vld [vmem:[%s1 + $0x10] sm:$0xff]
        %v224 = vld [vmem:[%s1 + $0x18] sm:$0xff]
        %v225 = vld [vmem:[%s1 + $0x20] sm:$0xff]
        %v226 = vld [vmem:[%s1 + $0x28] sm:$0xff]
        %v227 = vld [vmem:[%s1 + $0x30] sm:$0xff]
        %v228 = vld [vmem:[%s1 + $0x38] sm:$0xff]
        %v229 = vld [vmem:[%s1 + $0x40] sm:$0xff]
        %v230 = vld [vmem:[%s1 + $0x48] sm:$0xff]
        %v231 = vld [vmem:[%s1 + $0x50] sm:$0xff]
        %v232 = vld [vmem:[%s1 + $0x58] sm:$0xff]
        %v233 = vld [vmem:[%s1 + $0x60] sm:$0xff]
        %v234 = vld [vmem:[%s1 + $0x68] sm:$0xff]
        %v235 = vld [vmem:[%s1 + $0x70] sm:$0xff]
        %v236 = vld [vmem:[%s1 + $0x78] sm:$0xff]
        %v237 = vld [vmem:[%s2] sm:$0x1]
        %v238 = vlaneseq
        %v239 = vshrl.u32 %v238, 7
        %v240 = vsub.s32 0, %v239
        %v241 = vrot.slane %v237, %v240
        %242 = vmatprep.subr.mxu0 0.0
        %243 = vmatpush1.msra.mxu0 %v236
        %244 = vmatprep.subr.mxu0 0.0
        %245 = vmatpush1.msra.mxu0 %v235
        %246 = vmatprep.subr.mxu0 0.0
        %247 = vmatpush1.msra.mxu0 %v234
        %248 = vmatprep.subr.mxu0 0.0
        %249 = vmatpush1.msra.mxu0 %v233
        %250 = vmatprep.subr.mxu0 0.0
        %251 = vmatpush1.msra.mxu0 %v232
        %252 = vmatprep.subr.mxu0 0.0
        %253 = vmatpush1.msra.mxu0 %v231
        %254 = vmatprep.subr.mxu0 0.0
        %255 = vmatpush1.msra.mxu0 %v230
        %256 = vmatprep.subr.mxu0 0.0
        %257 = vmatpush1.msra.mxu0 %v229
        %258 = vmatprep.subr.mxu0 0.0
        %259 = vmatpush1.msra.mxu0 %v228
        %260 = vmatprep.subr.mxu0 0.0
        %261 = vmatpush1.msra.mxu0 %v227
        %262 = vmatprep.subr.mxu0 0.0
        %263 = vmatpush1.msra.mxu0 %v226
        %264 = vmatprep.subr.mxu0 0.0
        %265 = vmatpush1.msra.mxu0 %v225
        %266 = vmatprep.subr.mxu0 0.0
        %267 = vmatpush1.msra.mxu0 %v224
        %268 = vmatprep.subr.mxu0 0.0
        %269 = vmatpush1.msra.mxu0 %v223
        %270 = vmatprep.subr.mxu0 0.0
        %271 = vmatpush1.msra.mxu0 %v222
        %272 = vmatprep.subr.mxu0 0.0
        %273 = vmatpush1.msra.mxu0 %v221
        %274 = vmatprep.subr.mxu0 0.0
        %275 = vmatpush2.msra.mxu0 0.0
        %276 = vmatprep.subr.mxu0 0.0
        %277 = vmatpush2.msra.mxu0 0.0
        %278 = vmatprep.subr.mxu0 0.0
        %279 = vmatpush2.msra.mxu0 0.0
        %280 = vmatprep.subr.mxu0 0.0
        %281 = vmatpush2.msra.mxu0 0.0
        %282 = vmatprep.subr.mxu0 0.0
        %283 = vmatpush2.msra.mxu0 0.0
        %284 = vmatprep.subr.mxu0 0.0
        %285 = vmatpush2.msra.mxu0 0.0
        %286 = vmatprep.subr.mxu0 0.0
        %287 = vmatpush2.msra.mxu0 0.0
        %288 = vmatprep.subr.mxu0 0.0
        %289 = vmatpush2.msra.mxu0 0.0
        %290 = vmatprep.subr.mxu0 0.0
        %291 = vmatpush2.msra.mxu0 0.0
        %292 = vmatprep.subr.mxu0 0.0
        %293 = vmatpush2.msra.mxu0 0.0
        %294 = vmatprep.subr.mxu0 0.0
        %295 = vmatpush2.msra.mxu0 0.0
        %296 = vmatprep.subr.mxu0 0.0
        %297 = vmatpush2.msra.mxu0 0.0
        %298 = vmatprep.subr.mxu0 0.0
        %299 = vmatpush2.msra.mxu0 0.0
        %300 = vmatprep.subr.mxu0 0.0
        %301 = vmatpush2.msra.mxu0 0.0
        %302 = vmatprep.subr.mxu0 0.0
        %303 = vmatpush2.msra.mxu0 0.0
        %304 = vmatprep.subr.mxu0 0.0
        %305 = vmatpush2.msra.mxu0 0.0
        %306 = vmatprep.mubr.f32.mxu0 0.0
        %307 = vmatmul.mubr.f32.gmra.mxu0 %v214
        %v308 = vpop.f32.mrf.mxu0
        %v309 = vadd.f32 %v241, %v308
        %v310 = vpop.f32.mrf.mxu0
        %311 = vmatprep.mubr.f32.mxu0 0.0
        %312 = vmatmul.mubr.f32.gmra.mxu0 %v215
        %v313 = vpop.f32.mrf.mxu0
        %v314 = vadd.f32 %v241, %v313
        %v315 = vpop.f32.mrf.mxu0
        %316 = vmatprep.mubr.f32.mxu0 0.0
        %317 = vmatmul.mubr.f32.gmra.mxu0 %v216
        %v318 = vpop.f32.mrf.mxu0
        %v319 = vadd.f32 %v241, %v318
        %v320 = vpop.f32.mrf.mxu0
        %321 = vmatprep.mubr.f32.mxu0 0.0
        %322 = vmatmul.mubr.f32.gmra.mxu0 %v217
        %v323 = vpop.f32.mrf.mxu0
        %v324 = vadd.f32 %v241, %v323
        %v325 = vpop.f32.mrf.mxu0
        %326 = vmatprep.mubr.f32.mxu0 0.0
        %327 = vmatmul.mubr.f32.gmra.mxu0 %v218
        %v328 = vpop.f32.mrf.mxu0
        %v329 = vadd.f32 %v241, %v328
        %v330 = vpop.f32.mrf.mxu0
        %331 = vmatprep.mubr.f32.mxu0 0.0
        %332 = vmatmul.mubr.f32.gmra.mxu0 %v219
        %v333 = vpop.f32.mrf.mxu0
        %v334 = vadd.f32 %v241, %v333
        %v335 = vpop.f32.mrf.mxu0
        %336 = vmatprep.mubr.f32.mxu0 0.0
        %337 = vmatmul.mubr.f32.gmra.mxu0 %v220
        %v338 = vpop.f32.mrf.mxu0
        %v339 = vadd.f32 %v241, %v338
        %v340 = vpop.f32.mrf.mxu0
        %341 = vdwg.mxu0
        %v342 = vxor.u32 %v309, 2147483648
        %v343 = vxor.u32 %v314, 2147483648
        %v344 = vxor.u32 %v319, 2147483648
        %v345 = vxor.u32 %v324, 2147483648
        %v346 = vxor.u32 %v329, 2147483648
        %v347 = vxor.u32 %v334, 2147483648
        %v348 = vxor.u32 %v339, 2147483648
        %v349 = vmul.f32 %v342, 1.442695
        %v350 = vpow.pop %v349
        %v351 = vmul.f32 %v343, 1.442695
        %v352 = vpow.pop %v351
        %v353 = vmul.f32 %v344, 1.442695
        %v354 = vpow.pop %v353
        %v355 = vmul.f32 %v345, 1.442695
        %v356 = vpow.pop %v355
        %v357 = vmul.f32 %v346, 1.442695
        %v358 = vpow.pop %v357
        %v359 = vmul.f32 %v347, 1.442695
        %v360 = vpow.pop %v359
        %v361 = vmul.f32 %v348, 1.442695
        %v362 = vpow.pop %v361
        %v363 = vadd.f32 %v350, 1.0
        %v364 = vadd.f32 %v352, 1.0
        %v365 = vadd.f32 %v354, 1.0
        %v366 = vadd.f32 %v356, 1.0
        %v367 = vadd.f32 %v358, 1.0
        %v368 = vadd.f32 %v360, 1.0
        %v369 = vadd.f32 %v362, 1.0
        %v370 = vrcp.pop %v363
        %v371 = vmul.f32 1.0, %v370
        %v372 = vrcp.pop %v364
        %v373 = vmul.f32 1.0, %v372
        %v374 = vrcp.pop %v365
        %v375 = vmul.f32 1.0, %v374
        %v376 = vrcp.pop %v366
        %v377 = vmul.f32 1.0, %v376
        %v378 = vrcp.pop %v367
        %v379 = vmul.f32 1.0, %v378
        %v380 = vrcp.pop %v368
        %v381 = vmul.f32 1.0, %v380
        %v382 = vrcp.pop %v369
        %v383 = vmul.f32 1.0, %v382
        %v384 = vld [vmem:[%s2 + $0x1] sm:$0x1]
        %v385 = vlaneseq
        %v386 = vshrl.u32 %v385, 7
        %v387 = vsub.s32 0, %v386
        %v388 = vrot.slane %v384, %v387
        %v389 = vmul.f32 %v371, %v388
        %v390 = vmul.f32 %v373, %v388
        %v391 = vmul.f32 %v375, %v388
        %v392 = vmul.f32 %v377, %v388
        %v393 = vmul.f32 %v379, %v388
        %v394 = vmul.f32 %v381, %v388
        %v395 = vmul.f32 %v383, %v388
        %396 = vadd.xlane.f32.xlu0 %v389
        %v397 = vpop.xlane.xlu0 %396
        %398 = vadd.xlane.f32.xlu0 %v390
        %v399 = vpop.xlane.xlu0 %398
        %400 = vadd.xlane.f32.xlu0 %v391
        %v401 = vpop.xlane.xlu0 %400
        %402 = vadd.xlane.f32.xlu0 %v392
        %v403 = vpop.xlane.xlu0 %402
        %404 = vadd.xlane.f32.xlu0 %v393
        %v405 = vpop.xlane.xlu0 %404
        %406 = vadd.xlane.f32.xlu0 %v394
        %v407 = vpop.xlane.xlu0 %406
        %408 = vadd.xlane.f32.xlu0 %v395
        %v409 = vpop.xlane.xlu0 %408
        %v410 = vld [vmem:[%s2 + $0x2] sm:$0x1]
        %v411 = vlaneseq
        %v412 = vshrl.u32 %v411, 7
        %v413 = vsub.s32 0, %v412
        %v414 = vrot.slane %v410, %v413
        %v415 = vadd.f32 %v397, %v414
        %v416 = vadd.f32 %v399, %v414
        %v417 = vadd.f32 %v401, %v414
        %v418 = vadd.f32 %v403, %v414
        %v419 = vadd.f32 %v405, %v414
        %v420 = vadd.f32 %v407, %v414
        %v421 = vadd.f32 %v409, %v414
        %vm422 = vcmask 7168
        %423 = vst.msk [vmem:[%s172] sm:$0xff] %vm422, %v415
        %424 = vst.msk [vmem:[%s172 + $0x8] sm:$0xff] %vm422, %v416
        %425 = vst.msk [vmem:[%s172 + $0x10] sm:$0xff] %vm422, %v417
        %426 = vst.msk [vmem:[%s172 + $0x18] sm:$0xff] %vm422, %v418
        %427 = vst.msk [vmem:[%s172 + $0x20] sm:$0xff] %vm422, %v419
        %428 = vst.msk [vmem:[%s172 + $0x28] sm:$0xff] %vm422, %v420
        %429 = vst.msk [vmem:[%s172 + $0x30] sm:$0xff] %vm422, %v421
        %s430 = sand.u32 %s90, 1
        %s431 = sand.u32 %s90, 1
        %s432 = smul.addr %s431, 56
        %s433 = scalar_lea.vmem [#allocation3], %s432
        // Predicated region
        $region33: #{tpu_custom_call.1} parent=31 // pred_check
          %p434 = pneg %p100
        $region34: #{tpu_custom_call.1} parent=31 // pred_check_branch
          %436 = sbr.rel (%p434) target = $region36
        $region35: #{tpu_custom_call.1} parent=31 // pred_region
          %s437 = smul.u32 7, %s14
          %s438 = ssub.s32 13, %s437
          %p439 = scmp.lt.s32.totalorder %s438, 7
          %s440 = scalar_select %p439, %s438, 7
          %s441 = smul.u32 128, %s440
          %p442 = scmp.ne.s32.totalorder 0, %s441
          %s443 = smul.addr %s437, 8
          %s444 = scalar_lea.vmem %s3, %s443
          // Predicated region
          $region37: #{tpu_custom_call.1} parent=35 // pred_check
            %p445 = pneg %p442
          $region38: #{tpu_custom_call.1} parent=35 // pred_check_branch
            %447 = sbr.rel (%p445) target = $region40
          $region39: #{tpu_custom_call.1} parent=35 // pred_region
            // Predicated region
            $region41: #{tpu_custom_call.1} parent=39 // pred_check
              _
            $region42: #{tpu_custom_call.1} parent=39 // pred_check_branch
              %449 = sbr.rel (0) target = $region44
            $region43: #{tpu_custom_call.1} parent=39 // pred_region
              // Predicated region
              $region63: #{tpu_custom_call.1} parent=43 // pred_check
                _
              $region64: #{tpu_custom_call.1} parent=43 // pred_check_branch
                %512 = sbr.rel (0) target = $region66
              $region65: #{tpu_custom_call.1} parent=43 // pred_region
                %s513 = sdiv.u32.pop %s440, 7
                %s514 = srem.u32.pop %s440, 7
                // While loop
                $region67: #{tpu_custom_call.1} parent=65 // loop_pre_header
                  _
                $region68: #{tpu_custom_call.1} parent=65 // loop_header
                  %s516 = sphi 0, %s518
                  %p517 = scmp.ge.s32.totalorder %s516, %s513
                  %s521 = sphi 0, %s540
                  %s522 = sphi %s433, %s543
                  %s523 = sphi %s444, %s544
                $region69: #{tpu_custom_call.1} parent=65 // loop_header_branch
                  %520 = sbr.rel (%p517) target = $region73
                $region70: #{tpu_custom_call.1} parent=65 // loop_body
                  %v524 = vld [vmem:[%s522] sm:$0xff]
                  %525 = vst [vmem:[%s523] sm:$0xff] %v524
                  %v526 = vld [vmem:[%s522 + $0x8] sm:$0xff]
                  %527 = vst [vmem:[%s523 + $0x8] sm:$0xff] %v526
                  %v528 = vld [vmem:[%s522 + $0x10] sm:$0xff]
                  %529 = vst [vmem:[%s523 + $0x10] sm:$0xff] %v528
                  %v530 = vld [vmem:[%s522 + $0x18] sm:$0xff]
                  %531 = vst [vmem:[%s523 + $0x18] sm:$0xff] %v530
                  %v532 = vld [vmem:[%s522 + $0x20] sm:$0xff]
                  %533 = vst [vmem:[%s523 + $0x20] sm:$0xff] %v532
                  %v534 = vld [vmem:[%s522 + $0x28] sm:$0xff]
                  %535 = vst [vmem:[%s523 + $0x28] sm:$0xff] %v534
                  %v536 = vld [vmem:[%s522 + $0x30] sm:$0xff]
                  %537 = vst [vmem:[%s523 + $0x30] sm:$0xff] %v536
                  %s538 = sadd.s32 1, %s521
                  %p539 = scmp.ge.s32.totalorder %s538, %s513
                  %s540 = scalar_select %p539, 0, %s538
                  %s541 = smul.u32 %s540, 56
                  %s542 = smul.u32 %s540, 56
                  %s543 = scalar_lea.vmem %s433, %s541 [#allocation3]
                  %s544 = scalar_lea.vmem %s444, %s542
                $region71: #{tpu_custom_call.1} parent=65 // loop_footer
                  %s518 = sadd.s32 %s516, 1
                $region72: #{tpu_custom_call.1} parent=65 // loop_footer_branch
                  %515 = sbr.rel target = $region68
                $region73: #{tpu_custom_call.1} parent=65 // loop_exit
                  _
                %s545 = sdiv.u32.pop %s440, 7
                %s546 = srem.u32.pop %s440, 7
                %s547 = smul.u32 %s545, 7
                %s548 = smul.u32 8, %s547
                %s549 = scalar_lea.vmem %s433, %s548 [#allocation3]
                %s550 = smul.u32 8, %s547
                %s551 = scalar_lea.vmem %s444, %s550
                // While loop
                $region74: #{tpu_custom_call.1} parent=65 // loop_pre_header
                  _
                $region75: #{tpu_custom_call.1} parent=65 // loop_header
                  %s553 = sphi 0, %s555
                  %p554 = scmp.ge.s32.totalorder %s553, %s546
                  %s558 = sphi 0, %s565
                  %s559 = sphi %s549, %s568
                  %s560 = sphi %s551, %s569
                $region76: #{tpu_custom_call.1} parent=65 // loop_header_branch
                  %557 = sbr.rel (%p554) target = $region80
                $region77: #{tpu_custom_call.1} parent=65 // loop_body
                  %v561 = vld [vmem:[%s559] sm:$0xff]
                  %562 = vst [vmem:[%s560] sm:$0xff] %v561
                  %s563 = sadd.s32 1, %s558
                  %p564 = scmp.ge.s32.totalorder %s563, %s546
                  %s565 = scalar_select %p564, 0, %s563
                  %s566 = smul.u32 %s565, 8
                  %s567 = smul.u32 %s565, 8
                  %s568 = scalar_lea.vmem %s549, %s566 [#allocation3]
                  %s569 = scalar_lea.vmem %s551, %s567
                $region78: #{tpu_custom_call.1} parent=65 // loop_footer
                  %s555 = sadd.s32 %s553, 1
                $region79: #{tpu_custom_call.1} parent=65 // loop_footer_branch
                  %552 = sbr.rel target = $region75
                $region80: #{tpu_custom_call.1} parent=65 // loop_exit
                  _
              $region66: #{tpu_custom_call.1} parent=43 // pred_fallthru
                _
              // Predicated region
              $region81: #{tpu_custom_call.1} parent=43 // pred_check
                _
              $region82: #{tpu_custom_call.1} parent=43 // pred_check_branch
                %571 = sbr.rel target = $region84
              $region83: #{tpu_custom_call.1} parent=43 // pred_region
                _
              $region84: #{tpu_custom_call.1} parent=43 // pred_fallthru
                _
            $region44: #{tpu_custom_call.1} parent=39 // pred_fallthru
              _
            // Predicated region
            $region45: #{tpu_custom_call.1} parent=39 // pred_check
              _
            $region46: #{tpu_custom_call.1} parent=39 // pred_check_branch
              %451 = sbr.rel target = $region48
            $region47: #{tpu_custom_call.1} parent=39 // pred_region
              %s453 = ssub.s32 256, 1
              %s454 = sdiv.u32.pop %s440, 7
              %s455 = srem.u32.pop %s440, 7
              // While loop
              $region49: #{tpu_custom_call.1} parent=47 // loop_pre_header
                _
              $region50: #{tpu_custom_call.1} parent=47 // loop_header
                %s457 = sphi 0, %s459
                %p458 = scmp.ge.s32.totalorder %s457, %s454
                %s462 = sphi 0, %s481
                %s463 = sphi %s433, %s484
                %s464 = sphi %s444, %s485
              $region51: #{tpu_custom_call.1} parent=47 // loop_header_branch
                %461 = sbr.rel (%p458) target = $region55
              $region52: #{tpu_custom_call.1} parent=47 // loop_body
                %v465 = vld [vmem:[%s463] sm:%s453]
                %466 = vst [vmem:[%s464] sm:%s453] %v465
                %v467 = vld [vmem:[%s463 + $0x8] sm:%s453]
                %468 = vst [vmem:[%s464 + $0x8] sm:%s453] %v467
                %v469 = vld [vmem:[%s463 + $0x10] sm:%s453]
                %470 = vst [vmem:[%s464 + $0x10] sm:%s453] %v469
                %v471 = vld [vmem:[%s463 + $0x18] sm:%s453]
                %472 = vst [vmem:[%s464 + $0x18] sm:%s453] %v471
                %v473 = vld [vmem:[%s463 + $0x20] sm:%s453]
                %474 = vst [vmem:[%s464 + $0x20] sm:%s453] %v473
                %v475 = vld [vmem:[%s463 + $0x28] sm:%s453]
                %476 = vst [vmem:[%s464 + $0x28] sm:%s453] %v475
                %v477 = vld [vmem:[%s463 + $0x30] sm:%s453]
                %478 = vst [vmem:[%s464 + $0x30] sm:%s453] %v477
                %s479 = sadd.s32 1, %s462
                %p480 = scmp.ge.s32.totalorder %s479, %s454
                %s481 = scalar_select %p480, 0, %s479
                %s482 = smul.u32 %s481, 56
                %s483 = smul.u32 %s481, 56
                %s484 = scalar_lea.vmem %s433, %s482 [#allocation3]
                %s485 = scalar_lea.vmem %s444, %s483
              $region53: #{tpu_custom_call.1} parent=47 // loop_footer
                %s459 = sadd.s32 %s457, 1
              $region54: #{tpu_custom_call.1} parent=47 // loop_footer_branch
                %456 = sbr.rel target = $region50
              $region55: #{tpu_custom_call.1} parent=47 // loop_exit
                _
              %s486 = sdiv.u32.pop %s440, 7
              %s487 = srem.u32.pop %s440, 7
              %s488 = smul.u32 %s486, 7
              %s489 = smul.u32 8, %s488
              %s490 = scalar_lea.vmem %s433, %s489 [#allocation3]
              %s491 = smul.u32 8, %s488
              %s492 = scalar_lea.vmem %s444, %s491
              // While loop
              $region56: #{tpu_custom_call.1} parent=47 // loop_pre_header
                _
              $region57: #{tpu_custom_call.1} parent=47 // loop_header
                %s494 = sphi 0, %s496
                %p495 = scmp.ge.s32.totalorder %s494, %s487
                %s499 = sphi 0, %s506
                %s500 = sphi %s490, %s509
                %s501 = sphi %s492, %s510
              $region58: #{tpu_custom_call.1} parent=47 // loop_header_branch
                %498 = sbr.rel (%p495) target = $region62
              $region59: #{tpu_custom_call.1} parent=47 // loop_body
                %v502 = vld [vmem:[%s500] sm:%s453]
                %503 = vst [vmem:[%s501] sm:%s453] %v502
                %s504 = sadd.s32 1, %s499
                %p505 = scmp.ge.s32.totalorder %s504, %s487
                %s506 = scalar_select %p505, 0, %s504
                %s507 = smul.u32 %s506, 8
                %s508 = smul.u32 %s506, 8
                %s509 = scalar_lea.vmem %s490, %s507 [#allocation3]
                %s510 = scalar_lea.vmem %s492, %s508
              $region60: #{tpu_custom_call.1} parent=47 // loop_footer
                %s496 = sadd.s32 %s494, 1
              $region61: #{tpu_custom_call.1} parent=47 // loop_footer_branch
                %493 = sbr.rel target = $region57
              $region62: #{tpu_custom_call.1} parent=47 // loop_exit
                _
            $region48: #{tpu_custom_call.1} parent=39 // pred_fallthru
              _
          $region40: #{tpu_custom_call.1} parent=35 // pred_fallthru
            _
          %572 = vnop
        $region36: #{tpu_custom_call.1} parent=31 // pred_fallthru
          _
      $region32: #{tpu_custom_call.1} parent=5 // pred_fallthru
        _
      %p573 = scmp.le.s32.totalorder 2, %s9
      // Predicated region
      $region85: #{tpu_custom_call.1} parent=5 // pred_check
        %p574 = pneg %p573
      $region86: #{tpu_custom_call.1} parent=5 // pred_check_branch
        %576 = sbr.rel (%p574) target = $region88
      $region87: #{tpu_custom_call.1} parent=5 // pred_region
        %s577 = ssub.s32 %s9, 2
        // Predicated region
        $region89: #{tpu_custom_call.1} parent=87 // pred_check
          %p578 = pneg %p106
        $region90: #{tpu_custom_call.1} parent=87 // pred_check_branch
          %580 = sbr.rel (%p578) target = $region92
        $region91: #{tpu_custom_call.1} parent=87 // pred_region
          %s581 = sand.u32 %s91, 1
          %s582 = sand.u32 %s91, 1
          %s583 = smul.addr %s582, 56
          %s584 = scalar_lea.vmem [#allocation3], %s583
        $region92: #{tpu_custom_call.1} parent=87 // pred_fallthru
          _
      $region88: #{tpu_custom_call.1} parent=5 // pred_fallthru
        _
    $region6: #{tpu_custom_call.1} parent=1 // loop_footer
      %s13 = sadd.s32 1, %s9
    $region7: #{tpu_custom_call.1} parent=1 // loop_footer_branch
      %8 = sbr.rel target = $region3
    $region8: #{tpu_custom_call.1} parent=1 // loop_exit
      _

</llo_original>
